<compile_context>
chip_gen: v7x
topology: tpu7x:2x2x1
jax: 0.10.0
libtpu: 0.0.40
codegen_flags: <defaults>
</compile_context>

<pallas_src>
import functools

import jax
import jax.numpy as jnp
from jax import lax
from jax.experimental import pallas as pl
from jax.experimental.pallas import tpu as pltpu

# matches `missing_type_index` in the PyTorch source, ordered as modality_types
MODALITY_TYPES = ("language", "video", "audio")
MISSING_TYPE_CODES = (1, 2, 3)
LN_EPS = 1e-5  # PyTorch nn.LayerNorm default
LANE = 128
SUBLANE = 8


def _round_up(n, m):
    return ((n + m - 1) // m) * m


def _pad_to(a, shape):
    return jnp.pad(a, [(0, t - s) for s, t in zip(a.shape, shape)])


def modal_sum_kernel(x_ref, miss_ref, w_ref, pb_ref, g_ref, beta_ref,
                     w1_ref, b1_ref, w2_ref, b2_ref, o_ref,
                     *, n_modal, d_logical, missing_codes):
    cdt = w_ref.dtype                      # matmul compute dtype (bf16 or f32)
    tb = x_ref.shape[1]
    dp = w_ref.shape[2]

    miss = miss_ref[...]                   # [tb, 1] int32

    # ---- per-modality projection + missing-modality mask (sum on the fly) ----
    # Mask is a single [tb,1] broadcast multiply per modality; multiplying by
    # 0/1 is numerically identical to the PyTorch zero-assignment.
    fused = jnp.zeros((tb, dp), jnp.float32)
    for m in range(n_modal):               # small & static -> unrolled
        xm = x_ref[m].astype(cdt)          # [tb, F]  (cast in-kernel, x stays f32 in HBM)
        proj = jnp.dot(xm, w_ref[m], preferred_element_type=jnp.float32)
        proj = proj + pb_ref[m]            # f32 bias add on the VPU (precision)
        keep = (miss != missing_codes[m]).astype(jnp.float32)   # [tb, 1]
        fused = fused + keep * proj

    # ---- LayerNorm over the *logical* fusion dim (f32 math) ----
    # Padded columns of `fused` are exactly 0 (zero-padded weights & biases),
    # so the sums over the padded width equal the logical sums.
    inv_d = jnp.float32(1.0 / d_logical)
    mean = jnp.sum(fused, axis=-1, keepdims=True) * inv_d
    ex2 = jnp.sum(fused * fused, axis=-1, keepdims=True) * inv_d
    var = jnp.maximum(ex2 - mean * mean, 0.0)   # biased var, clamp vs cancellation
    normed = (fused - mean) * lax.rsqrt(var + LN_EPS) * g_ref[...] + beta_ref[...]
    # gamma/beta are zero-padded -> padded columns of `normed` are exactly 0.

    # ---- Head: Linear -> ReLU -> (Dropout == identity in eval) -> Linear ----
    # TODO(synk): training-mode Dropout not implemented (inference no-op).
    h = jnp.dot(normed.astype(cdt), w1_ref[...],
                preferred_element_type=jnp.float32) + b1_ref[...]
    h = jnp.maximum(h, 0.0)
    out = jnp.dot(h.astype(cdt), w2_ref[...],
                  preferred_element_type=jnp.float32) + b2_ref[...]

    o_ref[...] = out.astype(o_ref.dtype)   # lane-dense 128-wide store


def _vmem_limit_bytes(n_modal, f, dp, op, tb, compute_itemsize):
    """Size the scoped-VMEM request from actual buffers (v7x has only 64 MiB)."""
    f32 = 4
    x_tile = n_modal * tb * f * f32
    miss_tile = tb * f32
    out_tile = tb * op * f32
    weights = (n_modal * f * dp + dp * dp + dp * op) * compute_itemsize \
        + (n_modal * dp + 3 * dp + op) * f32
    intermediates = 6 * tb * dp * f32           # fused / normed / h / temporaries
    est = 2 * (x_tile + miss_tile + out_tile) + 2 * weights + intermediates
    return int(min(max(2 * est, 8 << 20), 32 << 20))


def modal_sum_forward(x, missing_index, params, *, tile_b=512,
                      compute_dtype=jnp.bfloat16, out_dtype=jnp.float32):
    """x: [M, B, F] float32, missing_index: [B] int -> [B, O] out_dtype."""
    M, B, F = x.shape
    F_w, D = params["proj_w"].shape[1:3]
    assert F_w == F
    O = params["head_w2"].shape[1]

    Dp = _round_up(D, LANE)
    Op = _round_up(O, LANE)

    # Batch tile: large (amortizes per-step overhead), multiple of 8 sublanes,
    # clamped to the batch; but guarantee >= 2 grid steps whenever the batch
    # permits so both v7x TensorCores get work under ("parallel",).
    bp8 = _round_up(B, SUBLANE)
    tb = min(_round_up(tile_b, SUBLANE), bp8)
    if bp8 >= 2 * SUBLANE and bp8 // tb < 2:
        tb = _round_up((bp8 + 1) // 2, SUBLANE)
    Bp = _round_up(B, tb)

    # ---- wrapper-side prep: NO transpose/concat/cast copy of x through HBM ----
    # x is consumed in its natural [M, B, F] layout; only the batch is padded
    # (a no-op when B is already a multiple of the tile).
    xp = x if Bp == B else _pad_to(x, (M, Bp, F))
    miss2d = missing_index.reshape(B, 1).astype(jnp.int32)
    if Bp != B:
        miss2d = _pad_to(miss2d, (Bp, 1))

    w = _pad_to(params["proj_w"], (M, F, Dp)).astype(compute_dtype)
    pb = _pad_to(params["proj_b"], (M, 1, Dp)).astype(jnp.float32)
    gam = _pad_to(params["ln_gamma"], (1, Dp)).astype(jnp.float32)  # zero-pad (NOT ones)
    bet = _pad_to(params["ln_beta"], (1, Dp)).astype(jnp.float32)
    w1 = _pad_to(params["head_w1"], (Dp, Dp)).astype(compute_dtype)
    b1 = _pad_to(params["head_b1"], (1, Dp)).astype(jnp.float32)
    w2 = _pad_to(params["head_w2"], (Dp, Op)).astype(compute_dtype)
    b2 = _pad_to(params["head_b2"], (1, Op)).astype(jnp.float32)

    kernel = functools.partial(
        modal_sum_kernel,
        n_modal=M, d_logical=D, missing_codes=MISSING_TYPE_CODES[:M])

    in_specs = [
        # streaming per-batch-tile operands
        pl.BlockSpec((M, tb, F), lambda i: (0, i, 0)),   # x (natural layout, tight K)
        pl.BlockSpec((tb, 1), lambda i: (i, 0)),         # missing_index
        # grid-invariant operands (index never changes -> DMA'd once).
        # For large fusion_dim on v7x, add pipeline_mode=pl.Buffered(1) to
        # drop their second buffer; negligible at Dp=Op=128.
        pl.BlockSpec((M, F, Dp), lambda i: (0, 0, 0)),   # projection weights
        pl.BlockSpec((M, 1, Dp), lambda i: (0, 0, 0)),   # projection biases
        pl.BlockSpec((1, Dp), lambda i: (0, 0)),         # ln gamma
        pl.BlockSpec((1, Dp), lambda i: (0, 0)),         # ln beta
        pl.BlockSpec((Dp, Dp), lambda i: (0, 0)),        # head w1
        pl.BlockSpec((1, Dp), lambda i: (0, 0)),         # head b1
        pl.BlockSpec((Dp, Op), lambda i: (0, 0)),        # head w2
        pl.BlockSpec((1, Op), lambda i: (0, 0)),         # head b2
    ]
    out_spec = pl.BlockSpec((tb, Op), lambda i: (i, 0))

    vmem_limit = _vmem_limit_bytes(M, F, Dp, Op, tb,
                                   jnp.dtype(compute_dtype).itemsize)

    out_padded = pl.pallas_call(
        kernel,
        out_shape=jax.ShapeDtypeStruct((Bp, Op), out_dtype),
        grid_spec=pltpu.PrefetchScalarGridSpec(
            num_scalar_prefetch=0,
            grid=(Bp // tb,),
            in_specs=in_specs,
            out_specs=out_spec,
        ),
        compiler_params=pltpu.CompilerParams(
            dimension_semantics=("parallel",),     # batch axis shards across TCs
            vmem_limit_bytes=vmem_limit,           # sized from buffers, v7x-safe
        ),
    )(xp, miss2d, w, pb, gam, bet, w1, b1, w2, b2)

    return out_padded[:B, :O]


def init_params(key, feature_dims, fusion_dim, output_dims, n_modal):
    ks = jax.random.split(key, 6)
    scale = 0.05
    return {
        "proj_w": scale * jax.random.normal(ks[0], (n_modal, feature_dims, fusion_dim), jnp.float32),
        "proj_b": scale * jax.random.normal(ks[1], (n_modal, 1, fusion_dim), jnp.float32),
        "ln_gamma": jnp.ones((1, fusion_dim), jnp.float32),
        "ln_beta": jnp.zeros((1, fusion_dim), jnp.float32),
        "head_w1": scale * jax.random.normal(ks[2], (fusion_dim, fusion_dim), jnp.float32),
        "head_b1": scale * jax.random.normal(ks[3], (1, fusion_dim), jnp.float32),
        "head_w2": scale * jax.random.normal(ks[4], (fusion_dim, output_dims), jnp.float32),
        "head_b2": scale * jax.random.normal(ks[5], (1, output_dims), jnp.float32),
    }


def reference_forward(x, missing_index, params):
    """Pure-JAX f32 reference mirroring the PyTorch forward (eval mode)."""
    M = x.shape[0]
    fused = 0.0
    for m in range(M):
        proj = x[m] @ params["proj_w"][m] + params["proj_b"][m]
        keep = (missing_index[:, None] != MISSING_TYPE_CODES[m]).astype(jnp.float32)
        fused = fused + keep * proj
    mean = fused.mean(-1, keepdims=True)
    var = ((fused - mean) ** 2).mean(-1, keepdims=True)
    normed = (fused - mean) / jnp.sqrt(var + LN_EPS) * params["ln_gamma"] + params["ln_beta"]
    h = jnp.maximum(normed @ params["head_w1"] + params["head_b1"], 0.0)
    return h @ params["head_w2"] + params["head_b2"]


if __name__ == "__main__":
    # small shapes implied by the module's forward
    M = len(MODALITY_TYPES)   # 3 modalities
    B = 16                    # batch
    F = 32                    # args.feature_dims
    D = 32                    # args.fusion_dim
    O = 8                     # output_dims

    key = jax.random.PRNGKey(0)
    kx, km, kp = jax.random.split(key, 3)

    x = jax.random.normal(kx, (M, B, F), jnp.float32)          # batch[modal] stacked
    missing_index = jax.random.randint(km, (B,), 0, 4, jnp.int32)
    params = init_params(kp, F, D, O, M)

    ref = reference_forward(x, missing_index, params)

    # 1) exact-arithmetic path (f32 operands), small tile to exercise the grid
    out_f32 = jax.block_until_ready(
        modal_sum_forward(x, missing_index, params, tile_b=8,
                          compute_dtype=jnp.float32))
    assert out_f32.shape == (B, O)
    assert jnp.max(jnp.abs(out_f32 - ref)) < 1e-4, "f32 path mismatch vs reference"

    # 2) fast path (bf16 matmul operands, f32 accumulation), default tiling
    #    (auto-splits the batch into >=2 grid steps for v7x megacore)
    out_bf16 = jax.block_until_ready(
        modal_sum_forward(x, missing_index, params))
    assert out_bf16.shape == (B, O)
    assert jnp.max(jnp.abs(out_bf16 - ref)) < 2e-2, "bf16 path mismatch vs reference"

    print("KERNEL_OK")
</pallas_src>

<mosaic_0001>
module attributes {stable_mosaic.version = 11 : i64} {
  func.func @modal_sum_kernel(%arg0: i32, %arg1: memref<3x8x32xf32, #tpu.memory_space<vmem>>, %arg2: memref<8x1xi32, #tpu.memory_space<vmem>>, %arg3: memref<3x32x128xf32, #tpu.memory_space<vmem>>, %arg4: memref<3x1x128xf32, #tpu.memory_space<vmem>>, %arg5: memref<1x128xf32, #tpu.memory_space<vmem>>, %arg6: memref<1x128xf32, #tpu.memory_space<vmem>>, %arg7: memref<128x128xf32, #tpu.memory_space<vmem>>, %arg8: memref<1x128xf32, #tpu.memory_space<vmem>>, %arg9: memref<128x128xf32, #tpu.memory_space<vmem>>, %arg10: memref<1x128xf32, #tpu.memory_space<vmem>>, %arg11: memref<8x128xf32, #tpu.memory_space<vmem>>) attributes {dimension_semantics = [#tpu.dimension_semantics<parallel>], iteration_bounds = array<i64: 2>, scalar_prefetch = 0 : i64, scratch_operands = 0 : i64, tpu.core_type = #tpu.core_type<tc>, window_params = [{transform_indices = @transform_0, window_bounds = array<i64: 3, 8, 32>}, {transform_indices = @transform_1, window_bounds = array<i64: 8, 1>}, {pipeline_mode = #tpu.pipeline_mode<synchronous>, transform_indices = @transform_2, window_bounds = array<i64: 3, 32, 128>}, {pipeline_mode = #tpu.pipeline_mode<synchronous>, transform_indices = @transform_3, window_bounds = array<i64: 3, 1, 128>}, {pipeline_mode = #tpu.pipeline_mode<synchronous>, transform_indices = @transform_4, window_bounds = array<i64: 1, 128>}, {pipeline_mode = #tpu.pipeline_mode<synchronous>, transform_indices = @transform_5, window_bounds = array<i64: 1, 128>}, {pipeline_mode = #tpu.pipeline_mode<synchronous>, transform_indices = @transform_6, window_bounds = array<i64: 128, 128>}, {pipeline_mode = #tpu.pipeline_mode<synchronous>, transform_indices = @transform_7, window_bounds = array<i64: 1, 128>}, {pipeline_mode = #tpu.pipeline_mode<synchronous>, transform_indices = @transform_8, window_bounds = array<i64: 128, 128>}, {pipeline_mode = #tpu.pipeline_mode<synchronous>, transform_indices = @transform_9, window_bounds = array<i64: 1, 128>}, {transform_indices = @transform_10, window_bounds = array<i64: 8, 128>}]} {
    %c0 = arith.constant 0 : index
    %c0_0 = arith.constant 0 : index
    %0 = vector.load %arg2[%c0, %c0_0] : memref<8x1xi32, #tpu.memory_space<vmem>>, vector<8x1xi32>
    %cst = arith.constant 0.000000e+00 : f32
    %1 = vector.broadcast %cst : f32 to vector<8x128xf32>
    %c0_1 = arith.constant 0 : index
    %c0_2 = arith.constant 0 : index
    %c0_3 = arith.constant 0 : index
    %2 = vector.load %arg1[%c0_1, %c0_2, %c0_3] : memref<3x8x32xf32, #tpu.memory_space<vmem>>, vector<1x8x32xf32>
    %3 = vector.shape_cast %2 : vector<1x8x32xf32> to vector<8x32xf32>
    %c0_4 = arith.constant 0 : index
    %c0_5 = arith.constant 0 : index
    %c0_6 = arith.constant 0 : index
    %4 = vector.load %arg3[%c0_4, %c0_5, %c0_6] : memref<3x32x128xf32, #tpu.memory_space<vmem>>, vector<1x32x128xf32>
    %5 = vector.shape_cast %4 : vector<1x32x128xf32> to vector<32x128xf32>
    %cst_7 = arith.constant dense<0.000000e+00> : vector<8x128xf32>
    %6 = tpu.matmul %3, %5, %cst_7 {dimension_numbers = #tpu.dot_dimension_numbers<[1], [0], [0], [1], [0, 0, 1, 1], [], []>} : vector<8x32xf32>, vector<32x128xf32>, vector<8x128xf32> -> vector<8x128xf32>
    %c0_8 = arith.constant 0 : index
    %c0_9 = arith.constant 0 : index
    %c0_10 = arith.constant 0 : index
    %7 = vector.load %arg4[%c0_8, %c0_9, %c0_10] : memref<3x1x128xf32, #tpu.memory_space<vmem>>, vector<1x1x128xf32>
    %8 = vector.shape_cast %7 : vector<1x1x128xf32> to vector<1x128xf32>
    %9 = vector.broadcast %8 : vector<1x128xf32> to vector<8x128xf32>
    %10 = arith.addf %6, %9 : vector<8x128xf32>
    %c1_i32 = arith.constant 1 : i32
    %11 = vector.broadcast %c1_i32 : i32 to vector<8x1xi32>
    %12 = arith.cmpi ne, %0, %11 : vector<8x1xi32>
    %13 = arith.extui %12 : vector<8x1xi1> to vector<8x1xi32>
    %14 = arith.sitofp %13 : vector<8x1xi32> to vector<8x1xf32>
    %15 = vector.broadcast %14 : vector<8x1xf32> to vector<8x128xf32>
    %16 = arith.mulf %15, %10 : vector<8x128xf32>
    %17 = arith.addf %1, %16 : vector<8x128xf32>
    %c1 = arith.constant 1 : index
    %c0_11 = arith.constant 0 : index
    %c0_12 = arith.constant 0 : index
    %18 = vector.load %arg1[%c1, %c0_11, %c0_12] : memref<3x8x32xf32, #tpu.memory_space<vmem>>, vector<1x8x32xf32>
    %19 = vector.shape_cast %18 : vector<1x8x32xf32> to vector<8x32xf32>
    %c1_13 = arith.constant 1 : index
    %c0_14 = arith.constant 0 : index
    %c0_15 = arith.constant 0 : index
    %20 = vector.load %arg3[%c1_13, %c0_14, %c0_15] : memref<3x32x128xf32, #tpu.memory_space<vmem>>, vector<1x32x128xf32>
    %21 = vector.shape_cast %20 : vector<1x32x128xf32> to vector<32x128xf32>
    %cst_16 = arith.constant dense<0.000000e+00> : vector<8x128xf32>
    %22 = tpu.matmul %19, %21, %cst_16 {dimension_numbers = #tpu.dot_dimension_numbers<[1], [0], [0], [1], [0, 0, 1, 1], [], []>} : vector<8x32xf32>, vector<32x128xf32>, vector<8x128xf32> -> vector<8x128xf32>
    %c1_17 = arith.constant 1 : index
    %c0_18 = arith.constant 0 : index
    %c0_19 = arith.constant 0 : index
    %23 = vector.load %arg4[%c1_17, %c0_18, %c0_19] : memref<3x1x128xf32, #tpu.memory_space<vmem>>, vector<1x1x128xf32>
    %24 = vector.shape_cast %23 : vector<1x1x128xf32> to vector<1x128xf32>
    %25 = vector.broadcast %24 : vector<1x128xf32> to vector<8x128xf32>
    %26 = arith.addf %22, %25 : vector<8x128xf32>
    %c2_i32 = arith.constant 2 : i32
    %27 = vector.broadcast %c2_i32 : i32 to vector<8x1xi32>
    %28 = arith.cmpi ne, %0, %27 : vector<8x1xi32>
    %29 = arith.extui %28 : vector<8x1xi1> to vector<8x1xi32>
    %30 = arith.sitofp %29 : vector<8x1xi32> to vector<8x1xf32>
    %31 = vector.broadcast %30 : vector<8x1xf32> to vector<8x128xf32>
    %32 = arith.mulf %31, %26 : vector<8x128xf32>
    %33 = arith.addf %17, %32 : vector<8x128xf32>
    %c2 = arith.constant 2 : index
    %c0_20 = arith.constant 0 : index
    %c0_21 = arith.constant 0 : index
    %34 = vector.load %arg1[%c2, %c0_20, %c0_21] : memref<3x8x32xf32, #tpu.memory_space<vmem>>, vector<1x8x32xf32>
    %35 = vector.shape_cast %34 : vector<1x8x32xf32> to vector<8x32xf32>
    %c2_22 = arith.constant 2 : index
    %c0_23 = arith.constant 0 : index
    %c0_24 = arith.constant 0 : index
    %36 = vector.load %arg3[%c2_22, %c0_23, %c0_24] : memref<3x32x128xf32, #tpu.memory_space<vmem>>, vector<1x32x128xf32>
    %37 = vector.shape_cast %36 : vector<1x32x128xf32> to vector<32x128xf32>
    %cst_25 = arith.constant dense<0.000000e+00> : vector<8x128xf32>
    %38 = tpu.matmul %35, %37, %cst_25 {dimension_numbers = #tpu.dot_dimension_numbers<[1], [0], [0], [1], [0, 0, 1, 1], [], []>} : vector<8x32xf32>, vector<32x128xf32>, vector<8x128xf32> -> vector<8x128xf32>
    %c2_26 = arith.constant 2 : index
    %c0_27 = arith.constant 0 : index
    %c0_28 = arith.constant 0 : index
    %39 = vector.load %arg4[%c2_26, %c0_27, %c0_28] : memref<3x1x128xf32, #tpu.memory_space<vmem>>, vector<1x1x128xf32>
    %40 = vector.shape_cast %39 : vector<1x1x128xf32> to vector<1x128xf32>
    %41 = vector.broadcast %40 : vector<1x128xf32> to vector<8x128xf32>
    %42 = arith.addf %38, %41 : vector<8x128xf32>
    %c3_i32 = arith.constant 3 : i32
    %43 = vector.broadcast %c3_i32 : i32 to vector<8x1xi32>
    %44 = arith.cmpi ne, %0, %43 : vector<8x1xi32>
    %45 = arith.extui %44 : vector<8x1xi1> to vector<8x1xi32>
    %46 = arith.sitofp %45 : vector<8x1xi32> to vector<8x1xf32>
    %47 = vector.broadcast %46 : vector<8x1xf32> to vector<8x128xf32>
    %48 = arith.mulf %47, %42 : vector<8x128xf32>
    %49 = arith.addf %33, %48 : vector<8x128xf32>
    %cst_29 = arith.constant dense<0.000000e+00> : vector<8xf32>
    %50 = vector.multi_reduction <add>, %49, %cst_29 [1] : vector<8x128xf32> to vector<8xf32>
    %51 = vector.shape_cast %50 : vector<8xf32> to vector<8x1xf32>
    %cst_30 = arith.constant 3.125000e-02 : f32
    %52 = vector.broadcast %cst_30 : f32 to vector<8x1xf32>
    %53 = arith.mulf %51, %52 : vector<8x1xf32>
    %54 = arith.mulf %49, %49 : vector<8x128xf32>
    %cst_31 = arith.constant dense<0.000000e+00> : vector<8xf32>
    %55 = vector.multi_reduction <add>, %54, %cst_31 [1] : vector<8x128xf32> to vector<8xf32>
    %56 = vector.shape_cast %55 : vector<8xf32> to vector<8x1xf32>
    %cst_32 = arith.constant 3.125000e-02 : f32
    %57 = vector.broadcast %cst_32 : f32 to vector<8x1xf32>
    %58 = arith.mulf %56, %57 : vector<8x1xf32>
    %59 = arith.mulf %53, %53 : vector<8x1xf32>
    %60 = arith.subf %58, %59 : vector<8x1xf32>
    %cst_33 = arith.constant 0.000000e+00 : f32
    %61 = vector.broadcast %cst_33 : f32 to vector<8x1xf32>
    %62 = arith.maximumf %60, %61 : vector<8x1xf32>
    %63 = vector.broadcast %53 : vector<8x1xf32> to vector<8x128xf32>
    %64 = arith.subf %49, %63 : vector<8x128xf32>
    %cst_34 = arith.constant 9.99999974E-6 : f32
    %65 = vector.broadcast %cst_34 : f32 to vector<8x1xf32>
    %66 = arith.addf %62, %65 : vector<8x1xf32>
    %67 = math.rsqrt %66 : vector<8x1xf32>
    %68 = vector.broadcast %67 : vector<8x1xf32> to vector<8x128xf32>
    %69 = arith.mulf %64, %68 : vector<8x128xf32>
    %c0_35 = arith.constant 0 : index
    %c0_36 = arith.constant 0 : index
    %70 = vector.load %arg5[%c0_35, %c0_36] : memref<1x128xf32, #tpu.memory_space<vmem>>, vector<1x128xf32>
    %71 = vector.broadcast %70 : vector<1x128xf32> to vector<8x128xf32>
    %72 = arith.mulf %69, %71 : vector<8x128xf32>
    %c0_37 = arith.constant 0 : index
    %c0_38 = arith.constant 0 : index
    %73 = vector.load %arg6[%c0_37, %c0_38] : memref<1x128xf32, #tpu.memory_space<vmem>>, vector<1x128xf32>
    %74 = vector.broadcast %73 : vector<1x128xf32> to vector<8x128xf32>
    %75 = arith.addf %72, %74 : vector<8x128xf32>
    %c0_39 = arith.constant 0 : index
    %c0_40 = arith.constant 0 : index
    %76 = vector.load %arg7[%c0_39, %c0_40] : memref<128x128xf32, #tpu.memory_space<vmem>>, vector<128x128xf32>
    %cst_41 = arith.constant dense<0.000000e+00> : vector<8x128xf32>
    %77 = tpu.matmul %75, %76, %cst_41 {dimension_numbers = #tpu.dot_dimension_numbers<[1], [0], [0], [1], [0, 0, 1, 1], [], []>} : vector<8x128xf32>, vector<128x128xf32>, vector<8x128xf32> -> vector<8x128xf32>
    %c0_42 = arith.constant 0 : index
    %c0_43 = arith.constant 0 : index
    %78 = vector.load %arg8[%c0_42, %c0_43] : memref<1x128xf32, #tpu.memory_space<vmem>>, vector<1x128xf32>
    %79 = vector.broadcast %78 : vector<1x128xf32> to vector<8x128xf32>
    %80 = arith.addf %77, %79 : vector<8x128xf32>
    %cst_44 = arith.constant 0.000000e+00 : f32
    %81 = vector.broadcast %cst_44 : f32 to vector<8x128xf32>
    %82 = arith.maximumf %80, %81 : vector<8x128xf32>
    %c0_45 = arith.constant 0 : index
    %c0_46 = arith.constant 0 : index
    %83 = vector.load %arg9[%c0_45, %c0_46] : memref<128x128xf32, #tpu.memory_space<vmem>>, vector<128x128xf32>
    %cst_47 = arith.constant dense<0.000000e+00> : vector<8x128xf32>
    %84 = tpu.matmul %82, %83, %cst_47 {dimension_numbers = #tpu.dot_dimension_numbers<[1], [0], [0], [1], [0, 0, 1, 1], [], []>} : vector<8x128xf32>, vector<128x128xf32>, vector<8x128xf32> -> vector<8x128xf32>
    %c0_48 = arith.constant 0 : index
    %c0_49 = arith.constant 0 : index
    %85 = vector.load %arg10[%c0_48, %c0_49] : memref<1x128xf32, #tpu.memory_space<vmem>>, vector<1x128xf32>
    %86 = vector.broadcast %85 : vector<1x128xf32> to vector<8x128xf32>
    %87 = arith.addf %84, %86 : vector<8x128xf32>
    %c0_50 = arith.constant 0 : index
    %c0_51 = arith.constant 0 : index
    %88 = vector.load %arg11[%c0_50, %c0_51] : memref<8x128xf32, #tpu.memory_space<vmem>>, vector<8x128xf32>
    tpu.vector_store %arg11[%c0_50, %c0_51], %87 {strides = array<i32>} : memref<8x128xf32, #tpu.memory_space<vmem>>, vector<8x128xf32>,
    return
  }
  func.func @transform_0(%arg0: i32) -> (i32, i32, i32) {
    %c0_i32 = arith.constant 0 : i32
    %c0_i32_0 = arith.constant 0 : i32
    %c0_i32_1 = arith.constant 0 : i32
    return %c0_i32, %arg0, %c0_i32_0 : i32, i32, i32
  }
  func.func @transform_1(%arg0: i32) -> (i32, i32) {
    %c0_i32 = arith.constant 0 : i32
    %c0_i32_0 = arith.constant 0 : i32
    return %arg0, %c0_i32 : i32, i32
  }
  func.func @transform_2(%arg0: i32) -> (i32, i32, i32) {
    %c0_i32 = arith.constant 0 : i32
    %c0_i32_0 = arith.constant 0 : i32
    %c0_i32_1 = arith.constant 0 : i32
    %c0_i32_2 = arith.constant 0 : i32
    return %c0_i32, %c0_i32_0, %c0_i32_1 : i32, i32, i32
  }
  func.func @transform_3(%arg0: i32) -> (i32, i32, i32) {
    %c0_i32 = arith.constant 0 : i32
    %c0_i32_0 = arith.constant 0 : i32
    %c0_i32_1 = arith.constant 0 : i32
    %c0_i32_2 = arith.constant 0 : i32
    return %c0_i32, %c0_i32_0, %c0_i32_1 : i32, i32, i32
  }
  func.func @transform_4(%arg0: i32) -> (i32, i32) {
    %c0_i32 = arith.constant 0 : i32
    %c0_i32_0 = arith.constant 0 : i32
    %c0_i32_1 = arith.constant 0 : i32
    return %c0_i32, %c0_i32_0 : i32, i32
  }
  func.func @transform_5(%arg0: i32) -> (i32, i32) {
    %c0_i32 = arith.constant 0 : i32
    %c0_i32_0 = arith.constant 0 : i32
    %c0_i32_1 = arith.constant 0 : i32
    return %c0_i32, %c0_i32_0 : i32, i32
  }
  func.func @transform_6(%arg0: i32) -> (i32, i32) {
    %c0_i32 = arith.constant 0 : i32
    %c0_i32_0 = arith.constant 0 : i32
    %c0_i32_1 = arith.constant 0 : i32
    return %c0_i32, %c0_i32_0 : i32, i32
  }
  func.func @transform_7(%arg0: i32) -> (i32, i32) {
    %c0_i32 = arith.constant 0 : i32
    %c0_i32_0 = arith.constant 0 : i32
    %c0_i32_1 = arith.constant 0 : i32
    return %c0_i32, %c0_i32_0 : i32, i32
  }
  func.func @transform_8(%arg0: i32) -> (i32, i32) {
    %c0_i32 = arith.constant 0 : i32
    %c0_i32_0 = arith.constant 0 : i32
    %c0_i32_1 = arith.constant 0 : i32
    return %c0_i32, %c0_i32_0 : i32, i32
  }
  func.func @transform_9(%arg0: i32) -> (i32, i32) {
    %c0_i32 = arith.constant 0 : i32
    %c0_i32_0 = arith.constant 0 : i32
    %c0_i32_1 = arith.constant 0 : i32
    return %c0_i32, %c0_i32_0 : i32, i32
  }
  func.func @transform_10(%arg0: i32) -> (i32, i32) {
    %c0_i32 = arith.constant 0 : i32
    %c0_i32_0 = arith.constant 0 : i32
    return %arg0, %c0_i32 : i32, i32
  }
}

</mosaic_0001>

<llo_original>
// kernel: tpu_custom_call.1
$region0: #{tpu_custom_call.1}
  #allocation0 [shape = 'u32[]', space=smem, size = 0x4, offset = 0x4, fixed_abs, tag = 'smem constant byte address 0x4 - core index']
  #allocation1 [shape = 'u32[144,128]{1,0:T(1,128)}', space=vmem, size = 0x12000, scoped, tag = 'internal scratch']
  %s0 = inlined_call_operand.hbm [shape: f32[3,16,32], index: 0, kind: input, shape index: {}]
  %s1 = inlined_call_operand.vmem [shape: s32[16,1], index: 1, kind: input, shape index: {}]
  %s2 = inlined_call_operand.hbm [shape: f32[3,32,128], index: 2, kind: input, shape index: {}]
  %s3 = inlined_call_operand.vmem [shape: f32[3,1,128], index: 3, kind: input, shape index: {}]
  %s4 = inlined_call_operand.vmem [shape: f32[1,128], index: 4, kind: input, shape index: {}]
  %s5 = inlined_call_operand.vmem [shape: f32[1,128], index: 5, kind: input, shape index: {}]
  %s6 = inlined_call_operand.hbm [shape: f32[128,128], index: 6, kind: input, shape index: {}]
  %s7 = inlined_call_operand.vmem [shape: f32[1,128], index: 7, kind: input, shape index: {}]
  %s8 = inlined_call_operand.hbm [shape: f32[128,128], index: 8, kind: input, shape index: {}]
  %s9 = inlined_call_operand.vmem [shape: f32[1,128], index: 9, kind: input, shape index: {}]
  %s10 = inlined_call_operand.hbm [shape: f32[16,128], index: 10, kind: output, shape index: {}]
  %s11 = sld [smem:[#allocation0]]
  $region89: #{tpu_custom_call.1} parent=0
    _
  %s13 = ssub.s32 1, %s11
  %s14 = scalar_select 0, %s13, %s11
  $region1: #{tpu_custom_call.1} parent=0
    #allocation2 [shape = 'u8[24576]{0}', space=vmem, size = 0x6000, scoped, tag = 'input window, operand 0']
    #allocation3 [shape = 's32[2]{0}', space=sflag, size = 0x8, scoped, tag = 'scoped memory for tpu_custom_call.1']
    #allocation4 [shape = 's32[2]{0}', space=sflag, size = 0x8, scoped, tag = 'scoped memory for tpu_custom_call.1']
    #allocation5 [shape = 'u8[49152]{0}', space=vmem, size = 0xc000, scoped, tag = 'input window, operand 2, single buffered']
    #allocation6 [shape = 's32[1]{0}', space=sflag, size = 0x4, scoped, tag = 'scoped memory for tpu_custom_call.1']
    #allocation7 [shape = 'u8[65536]{0}', space=vmem, size = 0x10000, scoped, tag = 'input window, operand 6, single buffered']
    #allocation8 [shape = 'u8[65536]{0}', space=vmem, size = 0x10000, scoped, tag = 'input window, operand 8, single buffered']
    #allocation9 [shape = 's32[1]{0}', space=sflag, size = 0x4, scoped, tag = 'scoped memory for tpu_custom_call.1']
    #allocation10 [shape = 'u8[8192]{0}', space=vmem, size = 0x2000, scoped, tag = 'output window, operand 0']
    %15 = vsyncpa [#allocation3], 0
    %s16 = scalar_lea.sflag [#allocation3], 1
    %17 = vsyncpa %s16, 0
    %18 = vsyncpa [#allocation6], 0
    %19 = vsyncpa [#allocation9], 0
    %20 = vsyncpa [#allocation4], 0
    %s21 = scalar_lea.sflag [#allocation4], 1
    %22 = vsyncpa %s21, 0
    loop: start=0, step=1, limit=4
    $region2: #{tpu_custom_call.1} parent=1 // loop_pre_header
      _
    $region3: #{tpu_custom_call.1} parent=1 // loop_header
      %s24 = sphi 0, %s28
      %p25 = scmp.ge.s32.totalorder %s24, 4
      %s34 = sphi 0, %s36
      %s37 = sphi 0, %s34
      %s38 = sphi 0, %s37
      %s54 = sphi 0, %s38
      %s60 = sphi 0, %s62
      %s63 = sphi 0, %s60
      %s64 = sphi 0, %s63
      %s80 = sphi 0, %s64
      %s84 = sphi 0, %s84
      %s86 = sphi 0, %s84
      %s87 = sphi 0, %s86
      %s101 = sphi 0, %s87
      %s105 = sphi 0, %s105
      %s107 = sphi 0, %s105
      %s108 = sphi 0, %s107
      %s122 = sphi 0, %s108
      %s126 = sphi 0, %s126
      %s128 = sphi 0, %s126
      %s129 = sphi 0, %s128
      %s143 = sphi 0, %s129
      %s147 = sphi 0, %s147
      %s149 = sphi 0, %s147
      %s150 = sphi 0, %s149
      %s164 = sphi 0, %s150
      %s168 = sphi 0, %s168
      %s170 = sphi 0, %s168
      %s171 = sphi 0, %s170
      %s185 = sphi 0, %s171
      %s189 = sphi 0, %s189
      %s191 = sphi 0, %s189
      %s192 = sphi 0, %s191
      %s206 = sphi 0, %s192
      %s210 = sphi 0, %s210
      %s212 = sphi 0, %s210
      %s213 = sphi 0, %s212
      %s227 = sphi 0, %s213
      %s231 = sphi 0, %s231
      %s233 = sphi 0, %s231
      %s234 = sphi 0, %s233
      %s248 = sphi 0, %s234
      %s254 = sphi 0, %s256
      %s257 = sphi 0, %s254
      %s258 = sphi 0, %s257
      %s274 = sphi 0, %s258
    $region4: #{tpu_custom_call.1} parent=1 // loop_header_branch
      %27 = sbr.rel (%p25) target = $region8
    $region5: #{tpu_custom_call.1} parent=1 // loop_body
      %s29 = ssub.s32 %s24, 1
      %s30 = ssub.s32 %s24, 2
      %s31 = sadd.s32 %s24, 1
      %s32 = ssub.s32 %s24, %s31
      %p33 = scmp.eq.s32.totalorder %s32, 0
      %s35 = sadd.s32 %s34, 1
      %s36 = scalar_select %p33, %s34, %s35
      %p39 = pneg %p33
      %p40 = scmp.eq.s32.totalorder %s24, 1
      %p41 = por %p39, %p40
      %p42 = scmp.ne.s32.totalorder %s34, %s37
      %p43 = scmp.eq.s32.totalorder %s24, 0
      %p44 = por %p42, %p43
      %p45 = scmp.ne.s32.totalorder %s34, %s37
      %p46 = scmp.eq.s32.totalorder %s29, 1
      %p47 = por %p45, %p46
      %p48 = scmp.ne.s32.totalorder %s37, %s38
      %p49 = scmp.eq.s32.totalorder %s29, 0
      %p50 = por %p48, %p49
      %p51 = scmp.ne.s32.totalorder %s37, %s38
      %p52 = scmp.eq.s32.totalorder %s30, 1
      %p53 = por %p51, %p52
      %p55 = scmp.ne.s32.totalorder %s38, %s54
      %p56 = scmp.eq.s32.totalorder %s30, 0
      %p57 = por %p55, %p56
      %s58 = ssub.s32 %s24, %s31
      %p59 = scmp.eq.s32.totalorder %s58, 0
      %s61 = sadd.s32 %s60, 1
      %s62 = scalar_select %p59, %s60, %s61
      %p65 = pneg %p59
      %p66 = scmp.eq.s32.totalorder %s24, 1
      %p67 = por %p65, %p66
      %p68 = scmp.ne.s32.totalorder %s60, %s63
      %p69 = scmp.eq.s32.totalorder %s24, 0
      %p70 = por %p68, %p69
      %p71 = scmp.ne.s32.totalorder %s60, %s63
      %p72 = scmp.eq.s32.totalorder %s29, 1
      %p73 = por %p71, %p72
      %p74 = scmp.ne.s32.totalorder %s63, %s64
      %p75 = scmp.eq.s32.totalorder %s29, 0
      %p76 = por %p74, %p75
      %p77 = scmp.ne.s32.totalorder %s63, %s64
      %p78 = scmp.eq.s32.totalorder %s30, 1
      %p79 = por %p77, %p78
      %p81 = scmp.ne.s32.totalorder %s64, %s80
      %p82 = scmp.eq.s32.totalorder %s30, 0
      %p83 = por %p81, %p82
      %s85 = sadd.s32 %s84, 1
      %p88 = scmp.eq.s32.totalorder %s24, 1
      %p89 = scmp.ne.s32.totalorder %s84, %s86
      %p90 = scmp.eq.s32.totalorder %s24, 0
      %p91 = por %p89, %p90
      %p92 = scmp.ne.s32.totalorder %s84, %s86
      %p93 = scmp.eq.s32.totalorder %s29, 1
      %p94 = por %p92, %p93
      %p95 = scmp.ne.s32.totalorder %s86, %s87
      %p96 = scmp.eq.s32.totalorder %s29, 0
      %p97 = por %p95, %p96
      %p98 = scmp.ne.s32.totalorder %s86, %s87
      %p99 = scmp.eq.s32.totalorder %s30, 1
      %p100 = por %p98, %p99
      %p102 = scmp.ne.s32.totalorder %s87, %s101
      %p103 = scmp.eq.s32.totalorder %s30, 0
      %p104 = por %p102, %p103
      %s106 = sadd.s32 %s105, 1
      %p109 = scmp.eq.s32.totalorder %s24, 1
      %p110 = scmp.ne.s32.totalorder %s105, %s107
      %p111 = scmp.eq.s32.totalorder %s24, 0
      %p112 = por %p110, %p111
      %p113 = scmp.ne.s32.totalorder %s105, %s107
      %p114 = scmp.eq.s32.totalorder %s29, 1
      %p115 = por %p113, %p114
      %p116 = scmp.ne.s32.totalorder %s107, %s108
      %p117 = scmp.eq.s32.totalorder %s29, 0
      %p118 = por %p116, %p117
      %p119 = scmp.ne.s32.totalorder %s107, %s108
      %p120 = scmp.eq.s32.totalorder %s30, 1
      %p121 = por %p119, %p120
      %p123 = scmp.ne.s32.totalorder %s108, %s122
      %p124 = scmp.eq.s32.totalorder %s30, 0
      %p125 = por %p123, %p124
      %s127 = sadd.s32 %s126, 1
      %p130 = scmp.eq.s32.totalorder %s24, 1
      %p131 = scmp.ne.s32.totalorder %s126, %s128
      %p132 = scmp.eq.s32.totalorder %s24, 0
      %p133 = por %p131, %p132
      %p134 = scmp.ne.s32.totalorder %s126, %s128
      %p135 = scmp.eq.s32.totalorder %s29, 1
      %p136 = por %p134, %p135
      %p137 = scmp.ne.s32.totalorder %s128, %s129
      %p138 = scmp.eq.s32.totalorder %s29, 0
      %p139 = por %p137, %p138
      %p140 = scmp.ne.s32.totalorder %s128, %s129
      %p141 = scmp.eq.s32.totalorder %s30, 1
      %p142 = por %p140, %p141
      %p144 = scmp.ne.s32.totalorder %s129, %s143
      %p145 = scmp.eq.s32.totalorder %s30, 0
      %p146 = por %p144, %p145
      %s148 = sadd.s32 %s147, 1
      %p151 = scmp.eq.s32.totalorder %s24, 1
      %p152 = scmp.ne.s32.totalorder %s147, %s149
      %p153 = scmp.eq.s32.totalorder %s24, 0
      %p154 = por %p152, %p153
      %p155 = scmp.ne.s32.totalorder %s147, %s149
      %p156 = scmp.eq.s32.totalorder %s29, 1
      %p157 = por %p155, %p156
      %p158 = scmp.ne.s32.totalorder %s149, %s150
      %p159 = scmp.eq.s32.totalorder %s29, 0
      %p160 = por %p158, %p159
      %p161 = scmp.ne.s32.totalorder %s149, %s150
      %p162 = scmp.eq.s32.totalorder %s30, 1
      %p163 = por %p161, %p162
      %p165 = scmp.ne.s32.totalorder %s150, %s164
      %p166 = scmp.eq.s32.totalorder %s30, 0
      %p167 = por %p165, %p166
      %s169 = sadd.s32 %s168, 1
      %p172 = scmp.eq.s32.totalorder %s24, 1
      %p173 = scmp.ne.s32.totalorder %s168, %s170
      %p174 = scmp.eq.s32.totalorder %s24, 0
      %p175 = por %p173, %p174
      %p176 = scmp.ne.s32.totalorder %s168, %s170
      %p177 = scmp.eq.s32.totalorder %s29, 1
      %p178 = por %p176, %p177
      %p179 = scmp.ne.s32.totalorder %s170, %s171
      %p180 = scmp.eq.s32.totalorder %s29, 0
      %p181 = por %p179, %p180
      %p182 = scmp.ne.s32.totalorder %s170, %s171
      %p183 = scmp.eq.s32.totalorder %s30, 1
      %p184 = por %p182, %p183
      %p186 = scmp.ne.s32.totalorder %s171, %s185
      %p187 = scmp.eq.s32.totalorder %s30, 0
      %p188 = por %p186, %p187
      %s190 = sadd.s32 %s189, 1
      %p193 = scmp.eq.s32.totalorder %s24, 1
      %p194 = scmp.ne.s32.totalorder %s189, %s191
      %p195 = scmp.eq.s32.totalorder %s24, 0
      %p196 = por %p194, %p195
      %p197 = scmp.ne.s32.totalorder %s189, %s191
      %p198 = scmp.eq.s32.totalorder %s29, 1
      %p199 = por %p197, %p198
      %p200 = scmp.ne.s32.totalorder %s191, %s192
      %p201 = scmp.eq.s32.totalorder %s29, 0
      %p202 = por %p200, %p201
      %p203 = scmp.ne.s32.totalorder %s191, %s192
      %p204 = scmp.eq.s32.totalorder %s30, 1
      %p205 = por %p203, %p204
      %p207 = scmp.ne.s32.totalorder %s192, %s206
      %p208 = scmp.eq.s32.totalorder %s30, 0
      %p209 = por %p207, %p208
      %s211 = sadd.s32 %s210, 1
      %p214 = scmp.eq.s32.totalorder %s24, 1
      %p215 = scmp.ne.s32.totalorder %s210, %s212
      %p216 = scmp.eq.s32.totalorder %s24, 0
      %p217 = por %p215, %p216
      %p218 = scmp.ne.s32.totalorder %s210, %s212
      %p219 = scmp.eq.s32.totalorder %s29, 1
      %p220 = por %p218, %p219
      %p221 = scmp.ne.s32.totalorder %s212, %s213
      %p222 = scmp.eq.s32.totalorder %s29, 0
      %p223 = por %p221, %p222
      %p224 = scmp.ne.s32.totalorder %s212, %s213
      %p225 = scmp.eq.s32.totalorder %s30, 1
      %p226 = por %p224, %p225
      %p228 = scmp.ne.s32.totalorder %s213, %s227
      %p229 = scmp.eq.s32.totalorder %s30, 0
      %p230 = por %p228, %p229
      %s232 = sadd.s32 %s231, 1
      %p235 = scmp.eq.s32.totalorder %s24, 1
      %p236 = scmp.ne.s32.totalorder %s231, %s233
      %p237 = scmp.eq.s32.totalorder %s24, 0
      %p238 = por %p236, %p237
      %p239 = scmp.ne.s32.totalorder %s231, %s233
      %p240 = scmp.eq.s32.totalorder %s29, 1
      %p241 = por %p239, %p240
      %p242 = scmp.ne.s32.totalorder %s233, %s234
      %p243 = scmp.eq.s32.totalorder %s29, 0
      %p244 = por %p242, %p243
      %p245 = scmp.ne.s32.totalorder %s233, %s234
      %p246 = scmp.eq.s32.totalorder %s30, 1
      %p247 = por %p245, %p246
      %p249 = scmp.ne.s32.totalorder %s234, %s248
      %p250 = scmp.eq.s32.totalorder %s30, 0
      %p251 = por %p249, %p250
      %s252 = ssub.s32 %s24, %s31
      %p253 = scmp.eq.s32.totalorder %s252, 0
      %s255 = sadd.s32 %s254, 1
      %s256 = scalar_select %p253, %s254, %s255
      %p259 = pneg %p253
      %p260 = scmp.eq.s32.totalorder %s24, 1
      %p261 = por %p259, %p260
      %p262 = scmp.ne.s32.totalorder %s254, %s257
      %p263 = scmp.eq.s32.totalorder %s24, 0
      %p264 = por %p262, %p263
      %p265 = scmp.ne.s32.totalorder %s254, %s257
      %p266 = scmp.eq.s32.totalorder %s29, 1
      %p267 = por %p265, %p266
      %p268 = scmp.ne.s32.totalorder %s257, %s258
      %p269 = scmp.eq.s32.totalorder %s29, 0
      %p270 = por %p268, %p269
      %p271 = scmp.ne.s32.totalorder %s257, %s258
      %p272 = scmp.eq.s32.totalorder %s30, 1
      %p273 = por %p271, %p272
      %p275 = scmp.ne.s32.totalorder %s258, %s274
      %p276 = scmp.eq.s32.totalorder %s30, 0
      %p277 = por %p275, %p276
      %p278 = scmp.le.s32.totalorder 1, %s24
      %p279 = scmp.lt.s32.totalorder %s24, 3
      %p280 = pnand %p278, %p279
      %p281 = pneg %p280
      // Predicated region
      $region9: #{tpu_custom_call.1} parent=5 // pred_check
        _
      $region10: #{tpu_custom_call.1} parent=5 // pred_check_branch
        %283 = sbr.rel (%p280) target = $region12
      $region11: #{tpu_custom_call.1} parent=5 // pred_region
        %s284 = ssub.s32 %s24, 1
        // Predicated region
        $region13: #{tpu_custom_call.1} parent=11 // pred_check
          %p285 = pneg %p97
        $region14: #{tpu_custom_call.1} parent=11 // pred_check_branch
          %287 = sbr.rel (%p285) target = $region16
        $region15: #{tpu_custom_call.1} parent=11 // pred_region
          %s289 = ssub.s32 1536, 1536
          %290 = vsyncadd [#allocation6], %s289
          %s291 = sshll.u32 [#allocation5], 4
          %s292 = int_to_ptr.vmem [resolvable:$true] %s291
          %297 = dma.hbm_to_vmem [thread:$0]  %s2, 1536, %s292, [#allocation6], 128, 128, 8
        $region16: #{tpu_custom_call.1} parent=11 // pred_fallthru
          _
        // Predicated region
        $region17: #{tpu_custom_call.1} parent=11 // pred_check
          %p298 = pneg %p118
        $region18: #{tpu_custom_call.1} parent=11 // pred_check_branch
          %300 = sbr.rel (%p298) target = $region20
        $region19: #{tpu_custom_call.1} parent=11 // pred_region
          _
        $region20: #{tpu_custom_call.1} parent=11 // pred_fallthru
          _
        // Predicated region
        $region21: #{tpu_custom_call.1} parent=11 // pred_check
          %p301 = pneg %p139
        $region22: #{tpu_custom_call.1} parent=11 // pred_check_branch
          %303 = sbr.rel (%p301) target = $region24
        $region23: #{tpu_custom_call.1} parent=11 // pred_region
          _
        $region24: #{tpu_custom_call.1} parent=11 // pred_fallthru
          _
        // Predicated region
        $region25: #{tpu_custom_call.1} parent=11 // pred_check
          %p304 = pneg %p160
        $region26: #{tpu_custom_call.1} parent=11 // pred_check_branch
          %306 = sbr.rel (%p304) target = $region28
        $region27: #{tpu_custom_call.1} parent=11 // pred_region
          _
        $region28: #{tpu_custom_call.1} parent=11 // pred_fallthru
          _
        // Predicated region
        $region29: #{tpu_custom_call.1} parent=11 // pred_check
          %p307 = pneg %p181
        $region30: #{tpu_custom_call.1} parent=11 // pred_check_branch
          %309 = sbr.rel (%p307) target = $region32
        $region31: #{tpu_custom_call.1} parent=11 // pred_region
          %s311 = ssub.s32 2048, 2048
          %312 = vsyncadd [#allocation6], %s311
          %s313 = sshll.u32 [#allocation7], 4
          %s314 = int_to_ptr.vmem [resolvable:$true] %s313
          %319 = dma.hbm_to_vmem [thread:$0]  %s6, 2048, %s314, [#allocation6], 128, 128, 8
        $region32: #{tpu_custom_call.1} parent=11 // pred_fallthru
          _
        // Predicated region
        $region33: #{tpu_custom_call.1} parent=11 // pred_check
          %p320 = pneg %p202
        $region34: #{tpu_custom_call.1} parent=11 // pred_check_branch
          %322 = sbr.rel (%p320) target = $region36
        $region35: #{tpu_custom_call.1} parent=11 // pred_region
          _
        $region36: #{tpu_custom_call.1} parent=11 // pred_fallthru
          _
        // Predicated region
        $region37: #{tpu_custom_call.1} parent=11 // pred_check
          %p323 = pneg %p223
        $region38: #{tpu_custom_call.1} parent=11 // pred_check_branch
          %325 = sbr.rel (%p323) target = $region40
        $region39: #{tpu_custom_call.1} parent=11 // pred_region
          %s327 = ssub.s32 2048, 2048
          %328 = vsyncadd [#allocation9], %s327
          %s329 = sshll.u32 [#allocation8], 4
          %s330 = int_to_ptr.vmem [resolvable:$true] %s329
          %335 = dma.hbm_to_vmem [thread:$0]  %s8, 2048, %s330, [#allocation9], 128, 128, 8
        $region40: #{tpu_custom_call.1} parent=11 // pred_fallthru
          _
        // Predicated region
        $region41: #{tpu_custom_call.1} parent=11 // pred_check
          %p336 = pneg %p244
        $region42: #{tpu_custom_call.1} parent=11 // pred_check_branch
          %338 = sbr.rel (%p336) target = $region44
        $region43: #{tpu_custom_call.1} parent=11 // pred_region
          _
        $region44: #{tpu_custom_call.1} parent=11 // pred_fallthru
          _
      $region12: #{tpu_custom_call.1} parent=5 // pred_fallthru
        _
      %p339 = scmp.lt.s32.totalorder %s24, 2
      // Predicated region
      $region45: #{tpu_custom_call.1} parent=5 // pred_check
        %p340 = pneg %p339
      $region46: #{tpu_custom_call.1} parent=5 // pred_check_branch
        %342 = sbr.rel (%p340) target = $region48
      $region47: #{tpu_custom_call.1} parent=5 // pred_region
        // Predicated region
        $region49: #{tpu_custom_call.1} parent=47 // pred_check
          %p343 = pneg %p44
        $region50: #{tpu_custom_call.1} parent=47 // pred_check_branch
          %345 = sbr.rel (%p343) target = $region52
        $region51: #{tpu_custom_call.1} parent=47 // pred_region
          %s346 = sand.u32 %s34, 1
          %s347 = scalar_lea.sflag [#allocation3], %s346
          %s348 = sand.u32 %s34, 1
          %s349 = smul.addr %s348, 24
          %s350 = scalar_lea.vmem [#allocation2], %s349
          %s352 = ssub.s32 384, 384
          %353 = vsyncadd %s347, %s352
          %s354 = smul.addr %s24, 128
          %s355 = scalar_lea.hbm %s0, %s354
          %s356 = sshll.u32 %s350, 4
          %s357 = int_to_ptr.vmem [resolvable:$true] %s356
          %362 = dma.hbm_to_vmem [thread:$0]  %s355, 384, %s357, %s347, 256, 128, 8
        $region52: #{tpu_custom_call.1} parent=47 // pred_fallthru
          _
        // Predicated region
        $region53: #{tpu_custom_call.1} parent=47 // pred_check
          %p363 = pneg %p70
        $region54: #{tpu_custom_call.1} parent=47 // pred_check_branch
          %365 = sbr.rel (%p363) target = $region56
        $region55: #{tpu_custom_call.1} parent=47 // pred_region
          %p366 = scmp.lt.s32.totalorder %s24, 1
          %s367 = scalar_select %p366, %s24, 1
          %s368 = smul.addr %s367, 8
          %s369 = scalar_lea.vmem %s1, %s368
        $region56: #{tpu_custom_call.1} parent=47 // pred_fallthru
          _
      $region48: #{tpu_custom_call.1} parent=5 // pred_fallthru
        _
      %p370 = scmp.le.s32.totalorder 1, %s24
      %p371 = scmp.lt.s32.totalorder %s24, 3
      %p372 = pnand %p370, %p371
      %p373 = pneg %p372
      // Predicated region
      $region57: #{tpu_custom_call.1} parent=5 // pred_check
        _
      $region58: #{tpu_custom_call.1} parent=5 // pred_check_branch
        %375 = sbr.rel (%p372) target = $region60
      $region59: #{tpu_custom_call.1} parent=5 // pred_region
        %s376 = ssub.s32 %s24, 1
        %s377 = sand.u32 %s37, 1
        %s378 = scalar_lea.sflag [#allocation3], %s377
        %s379 = sand.u32 %s37, 1
        %s380 = smul.addr %s379, 24
        %s381 = scalar_lea.vmem [#allocation2], %s380
        // Predicated region
        $region61: #{tpu_custom_call.1} parent=59 // pred_check
          %p382 = pneg %p50
        $region62: #{tpu_custom_call.1} parent=59 // pred_check_branch
          %384 = sbr.rel (%p382) target = $region64
        $region63: #{tpu_custom_call.1} parent=59 // pred_region
          %385 = dma.done %s378, 384
        $region64: #{tpu_custom_call.1} parent=59 // pred_fallthru
          _
        // Predicated region
        $region65: #{tpu_custom_call.1} parent=59 // pred_check
          %p386 = pneg %p97
        $region66: #{tpu_custom_call.1} parent=59 // pred_check_branch
          %388 = sbr.rel (%p386) target = $region68
        $region67: #{tpu_custom_call.1} parent=59 // pred_region
          %389 = dma.done [#allocation6], 1536
        $region68: #{tpu_custom_call.1} parent=59 // pred_fallthru
          _
        // Predicated region
        $region69: #{tpu_custom_call.1} parent=59 // pred_check
          %p390 = pneg %p181
        $region70: #{tpu_custom_call.1} parent=59 // pred_check_branch
          %392 = sbr.rel (%p390) target = $region72
        $region71: #{tpu_custom_call.1} parent=59 // pred_region
          %393 = dma.done [#allocation6], 2048
        $region72: #{tpu_custom_call.1} parent=59 // pred_fallthru
          _
        // Predicated region
        $region73: #{tpu_custom_call.1} parent=59 // pred_check
          %p394 = pneg %p223
        $region74: #{tpu_custom_call.1} parent=59 // pred_check_branch
          %396 = sbr.rel (%p394) target = $region76
        $region75: #{tpu_custom_call.1} parent=59 // pred_region
          %397 = dma.done [#allocation9], 2048
        $region76: #{tpu_custom_call.1} parent=59 // pred_fallthru
          _
        %s398 = sand.u32 %s37, 1
        %s399 = scalar_lea.sflag [#allocation3], %s398
        %s400 = sand.u32 %s37, 1
        %s401 = smul.addr %s400, 24
        %s402 = scalar_lea.vmem [#allocation2], %s401
        %p403 = pneg %p50
        %p404 = pneg %p47
        %p405 = scmp.lt.s32.totalorder %s29, 1
        %s406 = scalar_select %p405, %s29, 1
        %s407 = smul.addr %s406, 8
        %s408 = scalar_lea.vmem %s1, %s407
        %p409 = pneg %p76
        %p410 = pneg %p73
        %p411 = pneg %p97
        %p412 = pneg %p94
        %p413 = pneg %p118
        %p414 = pneg %p115
        %p415 = pneg %p139
        %p416 = pneg %p136
        %p417 = pneg %p160
        %p418 = pneg %p157
        %p419 = pneg %p181
        %p420 = pneg %p178
        %p421 = pneg %p202
        %p422 = pneg %p199
        %p423 = pneg %p223
        %p424 = pneg %p220
        %p425 = pneg %p244
        %p426 = pneg %p241
        %p427 = pneg %p270
        %p428 = pneg %p267
        %s429 = sand.u32 %s257, 1
        %s430 = scalar_lea.sflag [#allocation4], %s429
        %s431 = sand.u32 %s257, 1
        %s432 = smul.addr %s431, 8
        %s433 = scalar_lea.vmem [#allocation10], %s432
        %p434 = scmp.lt.s32.totalorder %s29, 1
        %s435 = scalar_select %p434, %s29, 1
        %s436 = smul.addr %s435, 8
        %s437 = scalar_lea.vmem %s1, %s436
        %v438 = vld [vmem:[%s437] sm:$0xff]
        %v439 = vld [vmem:[%s381] sm:$0xff]
        %v440 = vld [vmem:[#allocation5] sm:$0xff]
        %v441 = vld [vmem:[#allocation5 + $0x8] sm:$0xff]
        %v442 = vld [vmem:[#allocation5 + $0x10] sm:$0xff]
        %v443 = vld [vmem:[#allocation5 + $0x18] sm:$0xff]
        %v444 = vld [vmem:[%s3] sm:$0x1]
        %v446 = vlaneseq
        %v447 = vshrl.u32 %v446, 7
        %v448 = vsub.s32 0, %v447
        %v449 = vrot.slane %v444, %v448
        %vm451 = vcmask 261120
        %v453 = vsel %vm451, %v439, 0
        %455 = vmatprep.subr.mxu0 0.0
        %456 = vmatpush1.msra.mxu0 %v440
        %457 = vmatprep.subr.mxu0 0.0
        %458 = vmatpush1.msra.mxu0 %v441
        %459 = vmatprep.subr.mxu0 0.0
        %460 = vmatpush1.msra.mxu0 %v442
        %461 = vmatprep.subr.mxu0 0.0
        %462 = vmatpush1.msra.mxu0 %v443
        %463 = vmatprep.subr.mxu0 0.0
        %464 = vmatpush1.msra.mxu0 0.0
        %465 = vmatprep.subr.mxu0 0.0
        %466 = vmatpush1.msra.mxu0 0.0
        %467 = vmatprep.subr.mxu0 0.0
        %468 = vmatpush1.msra.mxu0 0.0
        %469 = vmatprep.subr.mxu0 0.0
        %470 = vmatpush1.msra.mxu0 0.0
        %471 = vmatprep.subr.mxu0 0.0
        %472 = vmatpush1.msra.mxu0 0.0
        %473 = vmatprep.subr.mxu0 0.0
        %474 = vmatpush1.msra.mxu0 0.0
        %475 = vmatprep.subr.mxu0 0.0
        %476 = vmatpush1.msra.mxu0 0.0
        %477 = vmatprep.subr.mxu0 0.0
        %478 = vmatpush1.msra.mxu0 0.0
        %479 = vmatprep.subr.mxu0 0.0
        %480 = vmatpush1.msra.mxu0 0.0
        %481 = vmatprep.subr.mxu0 0.0
        %482 = vmatpush1.msra.mxu0 0.0
        %483 = vmatprep.subr.mxu0 0.0
        %484 = vmatpush1.msra.mxu0 0.0
        %485 = vmatprep.subr.mxu0 0.0
        %486 = vmatpush1.msra.mxu0 0.0
        %487 = vmatprep.subr.mxu0 0.0
        %488 = vmatpush1.msra.mxu0 0.0
        %489 = vmatprep.subr.mxu0 0.0
        %490 = vmatpush1.msra.mxu0 0.0
        %491 = vmatprep.subr.mxu0 0.0
        %492 = vmatpush1.msra.mxu0 0.0
        %493 = vmatprep.subr.mxu0 0.0
        %494 = vmatpush1.msra.mxu0 0.0
        %495 = vmatprep.subr.mxu0 0.0
        %496 = vmatpush1.msra.mxu0 0.0
        %497 = vmatprep.subr.mxu0 0.0
        %498 = vmatpush1.msra.mxu0 0.0
        %499 = vmatprep.subr.mxu0 0.0
        %500 = vmatpush1.msra.mxu0 0.0
        %501 = vmatprep.subr.mxu0 0.0
        %502 = vmatpush1.msra.mxu0 0.0
        %503 = vmatprep.subr.mxu0 0.0
        %504 = vmatpush1.msra.mxu0 0.0
        %505 = vmatprep.subr.mxu0 0.0
        %506 = vmatpush1.msra.mxu0 0.0
        %507 = vmatprep.subr.mxu0 0.0
        %508 = vmatpush1.msra.mxu0 0.0
        %509 = vmatprep.subr.mxu0 0.0
        %510 = vmatpush1.msra.mxu0 0.0
        %511 = vmatprep.subr.mxu0 0.0
        %512 = vmatpush1.msra.mxu0 0.0
        %513 = vmatprep.subr.mxu0 0.0
        %514 = vmatpush1.msra.mxu0 0.0
        %515 = vmatprep.subr.mxu0 0.0
        %516 = vmatpush1.msra.mxu0 0.0
        %517 = vmatprep.subr.mxu0 0.0
        %518 = vmatpush1.msra.mxu0 0.0
        %519 = vmatprep.mubr.f32.mxu0 0.0
        %520 = vmatmul.mubr.f32.gmra.mrb[0].mxu0 %v453
        %v521 = vpop.f32.mrb[0].mxu0
        %v522 = vadd.f32 %v449, %v521
        %v523 = vpop.f32.mrb[0].mxu0
        %524 = vdwg.mxu0
        %vm525 = vcmp.ne.s32.totalorder %v438, 1
        %v526 = vsel %vm525, 1, 0
        %v527 = vcvt.s32.f32 %v526
        %529 = vset.pattern.permute.xlu0 0
        %530 = vperm.xlu0 %529, %v527
        %v531 = vpop.permute.xlu0 %530
        %v533 = vmul.f32 %v531, %v522
        %v534 = vadd.f32 %v533, 0.0
        %s535 = scalar_lea.vmem %s381, 8 [#allocation2]
        %v536 = vld [vmem:[%s535] sm:$0xff]
        %s537 = scalar_lea.vmem [#allocation5], 32
        %v538 = vld [vmem:[%s537] sm:$0xff]
        %v539 = vld [vmem:[%s537 + $0x8] sm:$0xff]
        %v540 = vld [vmem:[%s537 + $0x10] sm:$0xff]
        %v541 = vld [vmem:[%s537 + $0x18] sm:$0xff]
        %s542 = scalar_lea.vmem %s3, 1
        %v543 = vld [vmem:[%s542] sm:$0x1]
        %v545 = vlaneseq
        %v546 = vshrl.u32 %v545, 7
        %v547 = vsub.s32 0, %v546
        %v548 = vrot.slane %v543, %v547
        %v551 = vsel %vm451, %v536, 0
        %553 = vmatprep.subr.mxu0 0.0
        %554 = vmatpush1.msra.mxu0 %v538
        %555 = vmatprep.subr.mxu0 0.0
        %556 = vmatpush1.msra.mxu0 %v539
        %557 = vmatprep.subr.mxu0 0.0
        %558 = vmatpush1.msra.mxu0 %v540
        %559 = vmatprep.subr.mxu0 0.0
        %560 = vmatpush1.msra.mxu0 %v541
        %561 = vmatprep.subr.mxu0 0.0
        %562 = vmatpush1.msra.mxu0 0.0
        %563 = vmatprep.subr.mxu0 0.0
        %564 = vmatpush1.msra.mxu0 0.0
        %565 = vmatprep.subr.mxu0 0.0
        %566 = vmatpush1.msra.mxu0 0.0
        %567 = vmatprep.subr.mxu0 0.0
        %568 = vmatpush1.msra.mxu0 0.0
        %569 = vmatprep.subr.mxu0 0.0
        %570 = vmatpush1.msra.mxu0 0.0
        %571 = vmatprep.subr.mxu0 0.0
        %572 = vmatpush1.msra.mxu0 0.0
        %573 = vmatprep.subr.mxu0 0.0
        %574 = vmatpush1.msra.mxu0 0.0
        %575 = vmatprep.subr.mxu0 0.0
        %576 = vmatpush1.msra.mxu0 0.0
        %577 = vmatprep.subr.mxu0 0.0
        %578 = vmatpush1.msra.mxu0 0.0
        %579 = vmatprep.subr.mxu0 0.0
        %580 = vmatpush1.msra.mxu0 0.0
        %581 = vmatprep.subr.mxu0 0.0
        %582 = vmatpush1.msra.mxu0 0.0
        %583 = vmatprep.subr.mxu0 0.0
        %584 = vmatpush1.msra.mxu0 0.0
        %585 = vmatprep.subr.mxu0 0.0
        %586 = vmatpush1.msra.mxu0 0.0
        %587 = vmatprep.subr.mxu0 0.0
        %588 = vmatpush1.msra.mxu0 0.0
        %589 = vmatprep.subr.mxu0 0.0
        %590 = vmatpush1.msra.mxu0 0.0
        %591 = vmatprep.subr.mxu0 0.0
        %592 = vmatpush1.msra.mxu0 0.0
        %593 = vmatprep.subr.mxu0 0.0
        %594 = vmatpush1.msra.mxu0 0.0
        %595 = vmatprep.subr.mxu0 0.0
        %596 = vmatpush1.msra.mxu0 0.0
        %597 = vmatprep.subr.mxu0 0.0
        %598 = vmatpush1.msra.mxu0 0.0
        %599 = vmatprep.subr.mxu0 0.0
        %600 = vmatpush1.msra.mxu0 0.0
        %601 = vmatprep.subr.mxu0 0.0
        %602 = vmatpush1.msra.mxu0 0.0
        %603 = vmatprep.subr.mxu0 0.0
        %604 = vmatpush1.msra.mxu0 0.0
        %605 = vmatprep.subr.mxu0 0.0
        %606 = vmatpush1.msra.mxu0 0.0
        %607 = vmatprep.subr.mxu0 0.0
        %608 = vmatpush1.msra.mxu0 0.0
        %609 = vmatprep.subr.mxu0 0.0
        %610 = vmatpush1.msra.mxu0 0.0
        %611 = vmatprep.subr.mxu0 0.0
        %612 = vmatpush1.msra.mxu0 0.0
        %613 = vmatprep.subr.mxu0 0.0
        %614 = vmatpush1.msra.mxu0 0.0
        %615 = vmatprep.subr.mxu0 0.0
        %616 = vmatpush1.msra.mxu0 0.0
        %617 = vmatprep.mubr.f32.mxu0 0.0
        %618 = vmatmul.mubr.f32.gmra.mrb[0].mxu0 %v551
        %v619 = vpop.f32.mrb[0].mxu0
        %v620 = vadd.f32 %v548, %v619
        %v621 = vpop.f32.mrb[0].mxu0
        %622 = vdwg.mxu0
        %vm623 = vcmp.ne.s32.totalorder %v438, 2
        %v624 = vsel %vm623, 1, 0
        %v625 = vcvt.s32.f32 %v624
        %627 = vset.pattern.permute.xlu0 0
        %628 = vperm.xlu0 %627, %v625
        %v629 = vpop.permute.xlu0 %628
        %v631 = vmul.f32 %v629, %v620
        %v632 = vadd.f32 %v534, %v631
        %s633 = scalar_lea.vmem %s381, 16 [#allocation2]
        %v634 = vld [vmem:[%s633] sm:$0xff]
        %s635 = scalar_lea.vmem [#allocation5], 64
        %v636 = vld [vmem:[%s635] sm:$0xff]
        %v637 = vld [vmem:[%s635 + $0x8] sm:$0xff]
        %v638 = vld [vmem:[%s635 + $0x10] sm:$0xff]
        %v639 = vld [vmem:[%s635 + $0x18] sm:$0xff]
        %s640 = scalar_lea.vmem %s3, 2
        %v641 = vld [vmem:[%s640] sm:$0x1]
        %v643 = vlaneseq
        %v644 = vshrl.u32 %v643, 7
        %v645 = vsub.s32 0, %v644
        %v646 = vrot.slane %v641, %v645
        %v649 = vsel %vm451, %v634, 0
        %651 = vmatprep.subr.mxu0 0.0
        %652 = vmatpush1.msra.mxu0 %v636
        %653 = vmatprep.subr.mxu0 0.0
        %654 = vmatpush1.msra.mxu0 %v637
        %655 = vmatprep.subr.mxu0 0.0
        %656 = vmatpush1.msra.mxu0 %v638
        %657 = vmatprep.subr.mxu0 0.0
        %658 = vmatpush1.msra.mxu0 %v639
        %659 = vmatprep.subr.mxu0 0.0
        %660 = vmatpush1.msra.mxu0 0.0
        %661 = vmatprep.subr.mxu0 0.0
        %662 = vmatpush1.msra.mxu0 0.0
        %663 = vmatprep.subr.mxu0 0.0
        %664 = vmatpush1.msra.mxu0 0.0
        %665 = vmatprep.subr.mxu0 0.0
        %666 = vmatpush1.msra.mxu0 0.0
        %667 = vmatprep.subr.mxu0 0.0
        %668 = vmatpush1.msra.mxu0 0.0
        %669 = vmatprep.subr.mxu0 0.0
        %670 = vmatpush1.msra.mxu0 0.0
        %671 = vmatprep.subr.mxu0 0.0
        %672 = vmatpush1.msra.mxu0 0.0
        %673 = vmatprep.subr.mxu0 0.0
        %674 = vmatpush1.msra.mxu0 0.0
        %675 = vmatprep.subr.mxu0 0.0
        %676 = vmatpush1.msra.mxu0 0.0
        %677 = vmatprep.subr.mxu0 0.0
        %678 = vmatpush1.msra.mxu0 0.0
        %679 = vmatprep.subr.mxu0 0.0
        %680 = vmatpush1.msra.mxu0 0.0
        %681 = vmatprep.subr.mxu0 0.0
        %682 = vmatpush1.msra.mxu0 0.0
        %683 = vmatprep.subr.mxu0 0.0
        %684 = vmatpush1.msra.mxu0 0.0
        %685 = vmatprep.subr.mxu0 0.0
        %686 = vmatpush1.msra.mxu0 0.0
        %687 = vmatprep.subr.mxu0 0.0
        %688 = vmatpush1.msra.mxu0 0.0
        %689 = vmatprep.subr.mxu0 0.0
        %690 = vmatpush1.msra.mxu0 0.0
        %691 = vmatprep.subr.mxu0 0.0
        %692 = vmatpush1.msra.mxu0 0.0
        %693 = vmatprep.subr.mxu0 0.0
        %694 = vmatpush1.msra.mxu0 0.0
        %695 = vmatprep.subr.mxu0 0.0
        %696 = vmatpush1.msra.mxu0 0.0
        %697 = vmatprep.subr.mxu0 0.0
        %698 = vmatpush1.msra.mxu0 0.0
        %699 = vmatprep.subr.mxu0 0.0
        %700 = vmatpush1.msra.mxu0 0.0
        %701 = vmatprep.subr.mxu0 0.0
        %702 = vmatpush1.msra.mxu0 0.0
        %703 = vmatprep.subr.mxu0 0.0
        %704 = vmatpush1.msra.mxu0 0.0
        %705 = vmatprep.subr.mxu0 0.0
        %706 = vmatpush1.msra.mxu0 0.0
        %707 = vmatprep.subr.mxu0 0.0
        %708 = vmatpush1.msra.mxu0 0.0
        %709 = vmatprep.subr.mxu0 0.0
        %710 = vmatpush1.msra.mxu0 0.0
        %711 = vmatprep.subr.mxu0 0.0
        %712 = vmatpush1.msra.mxu0 0.0
        %713 = vmatprep.subr.mxu0 0.0
        %714 = vmatpush1.msra.mxu0 0.0
        %715 = vmatprep.mubr.f32.mxu0 0.0
        %716 = vmatmul.mubr.f32.gmra.mrb[0].mxu0 %v649
        %v717 = vpop.f32.mrb[0].mxu0
        %v718 = vadd.f32 %v646, %v717
        %v719 = vpop.f32.mrb[0].mxu0
        %720 = vdwg.mxu0
        %vm721 = vcmp.ne.s32.totalorder %v438, 3
        %v722 = vsel %vm721, 1, 0
        %v723 = vcvt.s32.f32 %v722
        %725 = vset.pattern.permute.xlu0 0
        %726 = vperm.xlu0 %725, %v723
        %v727 = vpop.permute.xlu0 %726
        %v729 = vmul.f32 %v727, %v718
        %v730 = vadd.f32 %v632, %v729
        %731 = vadd.xlane.f32.xlu0 %v730
        %v732 = vpop.xlane.xlu0 %731
        %v733 = vmul.f32 %v732, 0.03125
        %v734 = vmul.f32 %v730, %v730
        %735 = vadd.xlane.f32.xlu0 %v734
        %v736 = vpop.xlane.xlu0 %735
        %v737 = vmul.f32 %v736, 0.03125
        %v738 = vmul.f32 %v733, %v733
        %v739 = vsub.f32 %v737, %v738
        %v740 = vmax.f32 %v739, 0.0
        %v741 = vsub.f32 %v730, %v733
        %v742 = vadd.f32 %v740, 1e-05
        %v743 = vrsqrt.pop %v742
        %v744 = vmul.f32 %v741, %v743
        %v745 = vld [vmem:[%s4] sm:$0x1]
        %v747 = vlaneseq
        %v748 = vshrl.u32 %v747, 7
        %v749 = vsub.s32 0, %v748
        %v750 = vrot.slane %v745, %v749
        %v752 = vmul.f32 %v744, %v750
        %v753 = vld [vmem:[%s5] sm:$0x1]
        %v755 = vlaneseq
        %v756 = vshrl.u32 %v755, 7
        %v757 = vsub.s32 0, %v756
        %v758 = vrot.slane %v753, %v757
        %v760 = vadd.f32 %v752, %v758
        %v761 = vld [vmem:[#allocation7] sm:$0xff]
        %v762 = vld [vmem:[#allocation7 + $0x8] sm:$0xff]
        %v763 = vld [vmem:[#allocation7 + $0x10] sm:$0xff]
        %v764 = vld [vmem:[#allocation7 + $0x18] sm:$0xff]
        %v765 = vld [vmem:[#allocation7 + $0x20] sm:$0xff]
        %v766 = vld [vmem:[#allocation7 + $0x28] sm:$0xff]
        %v767 = vld [vmem:[#allocation7 + $0x30] sm:$0xff]
        %v768 = vld [vmem:[#allocation7 + $0x38] sm:$0xff]
        %v769 = vld [vmem:[#allocation7 + $0x40] sm:$0xff]
        %v770 = vld [vmem:[#allocation7 + $0x48] sm:$0xff]
        %v771 = vld [vmem:[#allocation7 + $0x50] sm:$0xff]
        %v772 = vld [vmem:[#allocation7 + $0x58] sm:$0xff]
        %v773 = vld [vmem:[#allocation7 + $0x60] sm:$0xff]
        %v774 = vld [vmem:[#allocation7 + $0x68] sm:$0xff]
        %v775 = vld [vmem:[#allocation7 + $0x70] sm:$0xff]
        %v776 = vld [vmem:[#allocation7 + $0x78] sm:$0xff]
        %v777 = vld [vmem:[%s7] sm:$0x1]
        %v779 = vlaneseq
        %v780 = vshrl.u32 %v779, 7
        %v781 = vsub.s32 0, %v780
        %v782 = vrot.slane %v777, %v781
        %784 = vmatprep.subr.mxu0 0.0
        %785 = vmatpush1.msra.mxu0 %v761
        %786 = vmatprep.subr.mxu0 0.0
        %787 = vmatpush1.msra.mxu0 %v762
        %788 = vmatprep.subr.mxu0 0.0
        %789 = vmatpush1.msra.mxu0 %v763
        %790 = vmatprep.subr.mxu0 0.0
        %791 = vmatpush1.msra.mxu0 %v764
        %792 = vmatprep.subr.mxu0 0.0
        %793 = vmatpush1.msra.mxu0 %v765
        %794 = vmatprep.subr.mxu0 0.0
        %795 = vmatpush1.msra.mxu0 %v766
        %796 = vmatprep.subr.mxu0 0.0
        %797 = vmatpush1.msra.mxu0 %v767
        %798 = vmatprep.subr.mxu0 0.0
        %799 = vmatpush1.msra.mxu0 %v768
        %800 = vmatprep.subr.mxu0 0.0
        %801 = vmatpush1.msra.mxu0 %v769
        %802 = vmatprep.subr.mxu0 0.0
        %803 = vmatpush1.msra.mxu0 %v770
        %804 = vmatprep.subr.mxu0 0.0
        %805 = vmatpush1.msra.mxu0 %v771
        %806 = vmatprep.subr.mxu0 0.0
        %807 = vmatpush1.msra.mxu0 %v772
        %808 = vmatprep.subr.mxu0 0.0
        %809 = vmatpush1.msra.mxu0 %v773
        %810 = vmatprep.subr.mxu0 0.0
        %811 = vmatpush1.msra.mxu0 %v774
        %812 = vmatprep.subr.mxu0 0.0
        %813 = vmatpush1.msra.mxu0 %v775
        %814 = vmatprep.subr.mxu0 0.0
        %815 = vmatpush1.msra.mxu0 %v776
        %816 = vmatprep.subr.mxu0 0.0
        %817 = vmatpush1.msra.mxu0 0.0
        %818 = vmatprep.subr.mxu0 0.0
        %819 = vmatpush1.msra.mxu0 0.0
        %820 = vmatprep.subr.mxu0 0.0
        %821 = vmatpush1.msra.mxu0 0.0
        %822 = vmatprep.subr.mxu0 0.0
        %823 = vmatpush1.msra.mxu0 0.0
        %824 = vmatprep.subr.mxu0 0.0
        %825 = vmatpush1.msra.mxu0 0.0
        %826 = vmatprep.subr.mxu0 0.0
        %827 = vmatpush1.msra.mxu0 0.0
        %828 = vmatprep.subr.mxu0 0.0
        %829 = vmatpush1.msra.mxu0 0.0
        %830 = vmatprep.subr.mxu0 0.0
        %831 = vmatpush1.msra.mxu0 0.0
        %832 = vmatprep.subr.mxu0 0.0
        %833 = vmatpush1.msra.mxu0 0.0
        %834 = vmatprep.subr.mxu0 0.0
        %835 = vmatpush1.msra.mxu0 0.0
        %836 = vmatprep.subr.mxu0 0.0
        %837 = vmatpush1.msra.mxu0 0.0
        %838 = vmatprep.subr.mxu0 0.0
        %839 = vmatpush1.msra.mxu0 0.0
        %840 = vmatprep.subr.mxu0 0.0
        %841 = vmatpush1.msra.mxu0 0.0
        %842 = vmatprep.subr.mxu0 0.0
        %843 = vmatpush1.msra.mxu0 0.0
        %844 = vmatprep.subr.mxu0 0.0
        %845 = vmatpush1.msra.mxu0 0.0
        %846 = vmatprep.subr.mxu0 0.0
        %847 = vmatpush1.msra.mxu0 0.0
        %848 = vmatprep.mubr.f32.mxu0 0.0
        %849 = vmatmul.mubr.f32.gmra.mrb[0].mxu0 %v760
        %v850 = vpop.f32.mrb[0].mxu0
        %v851 = vadd.f32 %v782, %v850
        %v852 = vpop.f32.mrb[0].mxu0
        %853 = vdwg.mxu0
        %v854 = vmax.f32 %v851, 0.0
        %v855 = vld [vmem:[#allocation8] sm:$0xff]
        %v856 = vld [vmem:[#allocation8 + $0x8] sm:$0xff]
        %v857 = vld [vmem:[#allocation8 + $0x10] sm:$0xff]
        %v858 = vld [vmem:[#allocation8 + $0x18] sm:$0xff]
        %v859 = vld [vmem:[#allocation8 + $0x20] sm:$0xff]
        %v860 = vld [vmem:[#allocation8 + $0x28] sm:$0xff]
        %v861 = vld [vmem:[#allocation8 + $0x30] sm:$0xff]
        %v862 = vld [vmem:[#allocation8 + $0x38] sm:$0xff]
        %v863 = vld [vmem:[#allocation8 + $0x40] sm:$0xff]
        %v864 = vld [vmem:[#allocation8 + $0x48] sm:$0xff]
        %v865 = vld [vmem:[#allocation8 + $0x50] sm:$0xff]
        %v866 = vld [vmem:[#allocation8 + $0x58] sm:$0xff]
        %v867 = vld [vmem:[#allocation8 + $0x60] sm:$0xff]
        %v868 = vld [vmem:[#allocation8 + $0x68] sm:$0xff]
        %v869 = vld [vmem:[#allocation8 + $0x70] sm:$0xff]
        %v870 = vld [vmem:[#allocation8 + $0x78] sm:$0xff]
        %v871 = vld [vmem:[%s9] sm:$0x1]
        %v873 = vlaneseq
        %v874 = vshrl.u32 %v873, 7
        %v875 = vsub.s32 0, %v874
        %v876 = vrot.slane %v871, %v875
        %878 = vmatprep.subr.mxu0 0.0
        %879 = vmatpush1.msra.mxu0 %v855
        %880 = vmatprep.subr.mxu0 0.0
        %881 = vmatpush1.msra.mxu0 %v856
        %882 = vmatprep.subr.mxu0 0.0
        %883 = vmatpush1.msra.mxu0 %v857
        %884 = vmatprep.subr.mxu0 0.0
        %885 = vmatpush1.msra.mxu0 %v858
        %886 = vmatprep.subr.mxu0 0.0
        %887 = vmatpush1.msra.mxu0 %v859
        %888 = vmatprep.subr.mxu0 0.0
        %889 = vmatpush1.msra.mxu0 %v860
        %890 = vmatprep.subr.mxu0 0.0
        %891 = vmatpush1.msra.mxu0 %v861
        %892 = vmatprep.subr.mxu0 0.0
        %893 = vmatpush1.msra.mxu0 %v862
        %894 = vmatprep.subr.mxu0 0.0
        %895 = vmatpush1.msra.mxu0 %v863
        %896 = vmatprep.subr.mxu0 0.0
        %897 = vmatpush1.msra.mxu0 %v864
        %898 = vmatprep.subr.mxu0 0.0
        %899 = vmatpush1.msra.mxu0 %v865
        %900 = vmatprep.subr.mxu0 0.0
        %901 = vmatpush1.msra.mxu0 %v866
        %902 = vmatprep.subr.mxu0 0.0
        %903 = vmatpush1.msra.mxu0 %v867
        %904 = vmatprep.subr.mxu0 0.0
        %905 = vmatpush1.msra.mxu0 %v868
        %906 = vmatprep.subr.mxu0 0.0
        %907 = vmatpush1.msra.mxu0 %v869
        %908 = vmatprep.subr.mxu0 0.0
        %909 = vmatpush1.msra.mxu0 %v870
        %910 = vmatprep.subr.mxu0 0.0
        %911 = vmatpush1.msra.mxu0 0.0
        %912 = vmatprep.subr.mxu0 0.0
        %913 = vmatpush1.msra.mxu0 0.0
        %914 = vmatprep.subr.mxu0 0.0
        %915 = vmatpush1.msra.mxu0 0.0
        %916 = vmatprep.subr.mxu0 0.0
        %917 = vmatpush1.msra.mxu0 0.0
        %918 = vmatprep.subr.mxu0 0.0
        %919 = vmatpush1.msra.mxu0 0.0
        %920 = vmatprep.subr.mxu0 0.0
        %921 = vmatpush1.msra.mxu0 0.0
        %922 = vmatprep.subr.mxu0 0.0
        %923 = vmatpush1.msra.mxu0 0.0
        %924 = vmatprep.subr.mxu0 0.0
        %925 = vmatpush1.msra.mxu0 0.0
        %926 = vmatprep.subr.mxu0 0.0
        %927 = vmatpush1.msra.mxu0 0.0
        %928 = vmatprep.subr.mxu0 0.0
        %929 = vmatpush1.msra.mxu0 0.0
        %930 = vmatprep.subr.mxu0 0.0
        %931 = vmatpush1.msra.mxu0 0.0
        %932 = vmatprep.subr.mxu0 0.0
        %933 = vmatpush1.msra.mxu0 0.0
        %934 = vmatprep.subr.mxu0 0.0
        %935 = vmatpush1.msra.mxu0 0.0
        %936 = vmatprep.subr.mxu0 0.0
        %937 = vmatpush1.msra.mxu0 0.0
        %938 = vmatprep.subr.mxu0 0.0
        %939 = vmatpush1.msra.mxu0 0.0
        %940 = vmatprep.subr.mxu0 0.0
        %941 = vmatpush1.msra.mxu0 0.0
        %942 = vmatprep.mubr.f32.mxu0 0.0
        %943 = vmatmul.mubr.f32.gmra.mrb[0].mxu0 %v854
        %v944 = vpop.f32.mrb[0].mxu0
        %v945 = vadd.f32 %v876, %v944
        %v946 = vpop.f32.mrb[0].mxu0
        %947 = vdwg.mxu0
        %948 = vst [vmem:[%s433] sm:$0xff] %v945
        %s949 = sand.u32 %s257, 1
        %s950 = scalar_lea.sflag [#allocation4], %s949
        %s951 = sand.u32 %s257, 1
        %s952 = smul.addr %s951, 8
        %s953 = scalar_lea.vmem [#allocation10], %s952
        // Predicated region
        $region77: #{tpu_custom_call.1} parent=59 // pred_check
          %p954 = pneg %p267
        $region78: #{tpu_custom_call.1} parent=59 // pred_check_branch
          %956 = sbr.rel (%p954) target = $region80
        $region79: #{tpu_custom_call.1} parent=59 // pred_region
          %s958 = ssub.s32 128, 128
          %959 = vsyncadd %s950, %s958
          %s960 = smul.addr %s29, 128
          %s961 = scalar_lea.hbm %s10, %s960
          %s963 = sshll.u32 %s953, 4
          %s964 = int_to_ptr.vmem [resolvable:$true] %s963
          %966 = dma.vmem_to_hbm [thread:$0]  %s964, 128, %s961, %s950
        $region80: #{tpu_custom_call.1} parent=59 // pred_fallthru
          _
      $region60: #{tpu_custom_call.1} parent=5 // pred_fallthru
        _
      %p967 = scmp.le.s32.totalorder 2, %s24
      // Predicated region
      $region81: #{tpu_custom_call.1} parent=5 // pred_check
        %p968 = pneg %p967
      $region82: #{tpu_custom_call.1} parent=5 // pred_check_branch
        %970 = sbr.rel (%p968) target = $region84
      $region83: #{tpu_custom_call.1} parent=5 // pred_region
        %s971 = ssub.s32 %s24, 2
        // Predicated region
        $region85: #{tpu_custom_call.1} parent=83 // pred_check
          %p972 = pneg %p273
        $region86: #{tpu_custom_call.1} parent=83 // pred_check_branch
          %974 = sbr.rel (%p972) target = $region88
        $region87: #{tpu_custom_call.1} parent=83 // pred_region
          %s975 = sand.u32 %s258, 1
          %s976 = scalar_lea.sflag [#allocation4], %s975
          %s977 = sand.u32 %s258, 1
          %s978 = smul.addr %s977, 8
          %s979 = scalar_lea.vmem [#allocation10], %s978
          %980 = dma.done %s976, 128
        $region88: #{tpu_custom_call.1} parent=83 // pred_fallthru
          _
      $region84: #{tpu_custom_call.1} parent=5 // pred_fallthru
        _
    $region6: #{tpu_custom_call.1} parent=1 // loop_footer
      %s28 = sadd.s32 1, %s24
    $region7: #{tpu_custom_call.1} parent=1 // loop_footer_branch
      %23 = sbr.rel target = $region3
    $region8: #{tpu_custom_call.1} parent=1 // loop_exit
      _
    %981 = vsyncpa [#allocation3], 1
    %s982 = scalar_lea.sflag [#allocation3], 1
    %983 = vsyncpa %s982, 1
    %984 = vsyncpa [#allocation6], 1
    %985 = vsyncpa [#allocation9], 1
    %986 = vsyncpa [#allocation4], 1
    %s987 = scalar_lea.sflag [#allocation4], 1
    %988 = vsyncpa %s987, 1

</llo_original>
